<compile_context>
chip_gen: v7x
topology: tpu7x:2x2x1
jax: 0.10.0
libtpu: 0.0.40
codegen_flags: <defaults>
</compile_context>

<pallas_src>
import jax
import jax.numpy as jnp
from jax.experimental import pallas as pl
from jax.experimental.pallas import tpu as pltpu


def _round_up(x: int, m: int) -> int:
    return ((x + m - 1) // m) * m


def _cdiv(a: int, b: int) -> int:
    return -(-a // b)


def _atomwise_kernel(x_ref, idx_ref, w1_ref, b1_ref, w2_ref, b2_ref,
                     y_ref, seg_h_ref, cnt_ref):
    """One (split s, atom-tile i) grid step.

    x_ref:     [TILE_N, n_in] f32   (streamed atom tile)
    idx_ref:   [1, TILE_N]    i32   (streamed, lane layout; padded atoms carry an
                                     out-of-range molecule id -> zero one-hot row)
    w1_ref:    [n_in, H] f32, b1_ref: [1, H]   (resident across the grid)
    w2_ref:    [H, O]    f32, b2_ref: [1, O]   (resident across the grid)
    y_ref:     [M, O] f32   output block of split s (written at last i only)
    seg_h_ref: [M, H] f32   VMEM accumulator: per-molecule summed hidden acts
    cnt_ref:   [M, 1] f32   VMEM accumulator: per-molecule atom counts
    """
    i = pl.program_id(1)

    @pl.when(i == 0)
    def _init():
        seg_h_ref[...] = jnp.zeros_like(seg_h_ref)
        cnt_ref[...] = jnp.zeros_like(cnt_ref)

    # --- layer 1 + silu (MXU matmul; exp on EUP, reciprocal via pl.reciprocal) ---
    h = jnp.dot(x_ref[...], w1_ref[...], preferred_element_type=jnp.float32)
    h = h + b1_ref[...]
    h = h * pl.reciprocal(1.0 + jnp.exp(-h))          # silu = h * sigmoid(h)

    # --- fused scatter_add of hidden activations ---
    # One-hot built already transposed ([M, TILE_N]) so no XLU transpose.
    n_mol, tile_n = seg_h_ref.shape[0], x_ref.shape[0]
    mol_iota = jax.lax.broadcasted_iota(jnp.int32, (n_mol, tile_n), 0)
    onehot_t = (mol_iota == idx_ref[...]).astype(jnp.float32)   # [M, TILE_N]

    seg_h_ref[...] += jnp.dot(onehot_t, h, preferred_element_type=jnp.float32)
    cnt_ref[...] += jnp.sum(onehot_t, axis=1, keepdims=True)

    # --- finalize: layer 2 applied once per split, lane-dense output store ---
    @pl.when(i == pl.num_programs(1) - 1)
    def _finalize():
        y_ref[...] = (jnp.dot(seg_h_ref[...], w2_ref[...],
                              preferred_element_type=jnp.float32)
                      + cnt_ref[...] * b2_ref[...])


def atomwise_forward(scalar_representation, idx_m, params, n_molecules,
                     aggregation_mode="sum", n_atoms_per_mol=None,
                     max_tile_n=512, num_splits=2):
    """JAX wrapper mirroring Atomwise.forward (default config).

    Returns dict with key 'y' -> [n_molecules] aggregated prediction
    (n_out == 1 is squeezed, matching torch.squeeze(y, -1)).
    """
    w1 = params["w1"].astype(jnp.float32)
    b1 = params["b1"].astype(jnp.float32).reshape(1, -1)
    w2 = params["w2"].astype(jnp.float32)
    b2 = params["b2"].astype(jnp.float32).reshape(1, -1)

    x = scalar_representation.astype(jnp.float32)
    n_atoms, n_in = x.shape
    n_hidden = w1.shape[1]
    n_out = w2.shape[1]

    # Zero-pad hidden / output feature dims to full MXU lane width (128).
    # Padded columns/rows are zero, so results are unchanged; every matmul and
    # the final HBM store become lane-dense.
    H = _round_up(max(n_hidden, 1), 128)
    O = _round_up(max(n_out, 1), 128)
    w1p = jnp.zeros((n_in, H), jnp.float32).at[:, :n_hidden].set(w1)
    b1p = jnp.zeros((1, H), jnp.float32).at[:, :n_hidden].set(b1)
    w2p = jnp.zeros((H, O), jnp.float32).at[:n_hidden, :n_out].set(w2)
    b2p = jnp.zeros((1, O), jnp.float32).at[:, :n_out].set(b2)

    # Atom tiling: TILE_N must be a multiple of 128 (lane-layout idx blocks)
    # and of 8 (f32 sublanes); capped at max_tile_n for pipelining.
    per_split = _cdiv(n_atoms, num_splits)
    tile_n = min(max_tile_n, _round_up(max(per_split, 1), 128))
    tiles_per_split = _cdiv(per_split, tile_n)
    n_pad = num_splits * tiles_per_split * tile_n

    x_pad = jnp.zeros((n_pad, n_in), jnp.float32).at[:n_atoms].set(x)
    # Padded atoms get molecule id == n_molecules (out of range) so their
    # one-hot rows are all-zero and they contribute nothing.
    idx_pad = jnp.full((1, n_pad), n_molecules, jnp.int32)
    idx_pad = idx_pad.at[0, :n_atoms].set(idx_m.astype(jnp.int32))

    resident = lambda shape: pl.BlockSpec(shape, lambda s, i: (0, 0))

    y_partial = pl.pallas_call(
        _atomwise_kernel,
        out_shape=jax.ShapeDtypeStruct((num_splits, n_molecules, O), jnp.float32),
        grid=(num_splits, tiles_per_split),
        in_specs=[
            # streamed atom tiles (double-buffered by Pallas)
            pl.BlockSpec((tile_n, n_in),
                         lambda s, i: (s * tiles_per_split + i, 0)),
            pl.BlockSpec((1, tile_n),
                         lambda s, i: (0, s * tiles_per_split + i)),
            # weights: constant block index -> DMA'd once, stay resident
            resident((n_in, H)),
            resident((1, H)),
            resident((H, O)),
            resident((1, O)),
        ],
        out_specs=pl.BlockSpec((None, n_molecules, O), lambda s, i: (s, 0, 0)),
        scratch_shapes=[
            pltpu.VMEM((n_molecules, H), jnp.float32),   # seg_h accumulator
            pltpu.VMEM((n_molecules, 1), jnp.float32),   # atom-count accumulator
        ],
        compiler_params=pltpu.CompilerParams(
            dimension_semantics=("parallel", "arbitrary"),
            vmem_limit_bytes=48 * 1024 * 1024,
        ),
    )(x_pad, idx_pad, w1p, b1p, w2p, b2p)

    # Tiny cross-split reduction + slice back to the real output width.
    y = jnp.sum(y_partial, axis=0)[:, :n_out]            # [n_molecules, n_out]
    if n_out == 1:
        y = jnp.squeeze(y, -1)                            # matches torch.squeeze(y, -1)
    if aggregation_mode == "avg":
        y = y / n_atoms_per_mol

    # TODO(synk): per_atom_output_key / aggregation_mode=None (per-atom output)
    # is fused away here; a separate unfused kernel would be needed for it.
    return {"y": y}


def init_params(key, n_in, n_out=1, n_hidden=None, n_layers=2):
    """Deterministic params for build_mlp with pyramidal hidden sizes (n_layers=2)."""
    if n_hidden is None:
        n_hidden = max(n_in // 2, n_out)
    k1, k2, k3, k4 = jax.random.split(key, 4)
    scale1 = 1.0 / jnp.sqrt(n_in)
    scale2 = 1.0 / jnp.sqrt(n_hidden)
    return {
        "w1": (jax.random.normal(k1, (n_in, n_hidden), jnp.float32) * scale1),
        "b1": (jax.random.normal(k2, (1, n_hidden), jnp.float32) * 0.01),
        "w2": (jax.random.normal(k3, (n_hidden, n_out), jnp.float32) * scale2),
        "b2": (jax.random.normal(k4, (1, n_out), jnp.float32) * 0.01),
    }


def _reference(x, idx_m, params, n_molecules):
    """Pure-JAX reference for correctness check."""
    h = x @ params["w1"] + params["b1"]
    h = jax.nn.silu(h)
    y_atom = h @ params["w2"] + params["b2"]
    y = jax.ops.segment_sum(y_atom, idx_m, num_segments=n_molecules)
    return jnp.squeeze(y, -1)


if __name__ == "__main__":
    key = jax.random.PRNGKey(0)
    kx, kp = jax.random.split(key)

    n_atoms = 32      # total atoms in batch
    n_in = 32         # representation dim
    n_out = 1
    n_molecules = 2   # maxm = int(idx_m[-1]) + 1

    # scalar_representation: [n_atoms, n_in]
    x = jax.random.normal(kx, (n_atoms, n_in), jnp.float32)
    # idx_m: molecule index per atom (sorted, as in schnetpack batches)
    idx_m = jnp.concatenate([
        jnp.zeros((20,), jnp.int32),
        jnp.ones((12,), jnp.int32),
    ])

    params = init_params(kp, n_in, n_out)

    out = atomwise_forward(x, idx_m, params, n_molecules,
                           aggregation_mode="sum")
    y = jax.block_until_ready(out["y"])

    y_ref = _reference(x, idx_m, params, n_molecules)
    assert y.shape == (n_molecules,)
    assert jnp.allclose(y, y_ref, atol=1e-4, rtol=1e-4), (y, y_ref)

    print("KERNEL_OK")
</pallas_src>

<mosaic_0001>
module attributes {stable_mosaic.version = 11 : i64} {
  func.func @_atomwise_kernel(%arg0: i32, %arg1: i32, %arg2: memref<128x32xf32, #tpu.memory_space<vmem>>, %arg3: memref<1x128xi32, #tpu.memory_space<vmem>>, %arg4: memref<32x128xf32, #tpu.memory_space<vmem>>, %arg5: memref<1x128xf32, #tpu.memory_space<vmem>>, %arg6: memref<128x128xf32, #tpu.memory_space<vmem>>, %arg7: memref<1x128xf32, #tpu.memory_space<vmem>>, %arg8: memref<1x2x128xf32, #tpu.memory_space<vmem>>, %arg9: memref<2x128xf32, #tpu.memory_space<vmem>>, %arg10: memref<2x1xf32, #tpu.memory_space<vmem>>) attributes {dimension_semantics = [#tpu.dimension_semantics<parallel>, #tpu.dimension_semantics<arbitrary>], iteration_bounds = array<i64: 2, 1>, scalar_prefetch = 0 : i64, scratch_operands = 2 : i64, tpu.core_type = #tpu.core_type<tc>, window_params = [{transform_indices = @transform_0, window_bounds = array<i64: 128, 32>}, {transform_indices = @transform_1, window_bounds = array<i64: 1, 128>}, {pipeline_mode = #tpu.pipeline_mode<synchronous>, transform_indices = @transform_2, window_bounds = array<i64: 32, 128>}, {pipeline_mode = #tpu.pipeline_mode<synchronous>, transform_indices = @transform_3, window_bounds = array<i64: 1, 128>}, {pipeline_mode = #tpu.pipeline_mode<synchronous>, transform_indices = @transform_4, window_bounds = array<i64: 128, 128>}, {pipeline_mode = #tpu.pipeline_mode<synchronous>, transform_indices = @transform_5, window_bounds = array<i64: 1, 128>}, {transform_indices = @transform_6, window_bounds = array<i64: 1, 2, 128>}]} {
    %c0_i32 = arith.constant 0 : i32
    %0 = arith.cmpi eq, %arg1, %c0_i32 : i32
    %1 = arith.extui %0 : i1 to i32
    %c0_i32_0 = arith.constant 0 : i32
    %2 = arith.cmpi ne, %1, %c0_i32_0 : i32
    scf.if %2 {
      %cst_22 = arith.constant 0.000000e+00 : f32
      %34 = vector.broadcast %cst_22 : f32 to vector<2x128xf32>
      %c0_23 = arith.constant 0 : index
      %c0_24 = arith.constant 0 : index
      %35 = vector.load %arg9[%c0_23, %c0_24] : memref<2x128xf32, #tpu.memory_space<vmem>>, vector<2x128xf32>
      tpu.vector_store %arg9[%c0_23, %c0_24], %34 {strides = array<i32>} : memref<2x128xf32, #tpu.memory_space<vmem>>, vector<2x128xf32>,
      %cst_25 = arith.constant 0.000000e+00 : f32
      %36 = vector.broadcast %cst_25 : f32 to vector<2x1xf32>
      %c0_26 = arith.constant 0 : index
      %c0_27 = arith.constant 0 : index
      %37 = vector.load %arg10[%c0_26, %c0_27] : memref<2x1xf32, #tpu.memory_space<vmem>>, vector<2x1xf32>
      tpu.vector_store %arg10[%c0_26, %c0_27], %36 {strides = array<i32>} : memref<2x1xf32, #tpu.memory_space<vmem>>, vector<2x1xf32>,
    } else {
    }
    %c0 = arith.constant 0 : index
    %c0_1 = arith.constant 0 : index
    %3 = vector.load %arg2[%c0, %c0_1] : memref<128x32xf32, #tpu.memory_space<vmem>>, vector<128x32xf32>
    %c0_2 = arith.constant 0 : index
    %c0_3 = arith.constant 0 : index
    %4 = vector.load %arg4[%c0_2, %c0_3] : memref<32x128xf32, #tpu.memory_space<vmem>>, vector<32x128xf32>
    %cst = arith.constant dense<0.000000e+00> : vector<128x128xf32>
    %5 = tpu.matmul %3, %4, %cst {dimension_numbers = #tpu.dot_dimension_numbers<[1], [0], [0], [1], [0, 0, 1, 1], [], []>} : vector<128x32xf32>, vector<32x128xf32>, vector<128x128xf32> -> vector<128x128xf32>
    %c0_4 = arith.constant 0 : index
    %c0_5 = arith.constant 0 : index
    %6 = vector.load %arg5[%c0_4, %c0_5] : memref<1x128xf32, #tpu.memory_space<vmem>>, vector<1x128xf32>
    %7 = vector.broadcast %6 : vector<1x128xf32> to vector<128x128xf32>
    %8 = arith.addf %5, %7 : vector<128x128xf32>
    %cst_6 = arith.constant 0.000000e+00 : f32
    %9 = vector.broadcast %cst_6 : f32 to vector<128x128xf32>
    %10 = arith.subf %9, %8 : vector<128x128xf32>
    %11 = math.exp %10 : vector<128x128xf32>
    %cst_7 = arith.constant 1.000000e+00 : f32
    %12 = vector.broadcast %cst_7 : f32 to vector<128x128xf32>
    %13 = arith.addf %12, %11 : vector<128x128xf32>
    %14 = tpu.reciprocal %13 : vector<128x128xf32> -> vector<128x128xf32>
    %15 = arith.mulf %8, %14 : vector<128x128xf32>
    %16 = tpu.iota {dimensions = array<i32: 0>} : vector<2x128xi32>
    %c0_8 = arith.constant 0 : index
    %c0_9 = arith.constant 0 : index
    %17 = vector.load %arg3[%c0_8, %c0_9] : memref<1x128xi32, #tpu.memory_space<vmem>>, vector<1x128xi32>
    %18 = vector.broadcast %17 : vector<1x128xi32> to vector<2x128xi32>
    %19 = arith.cmpi eq, %16, %18 : vector<2x128xi32>
    %20 = arith.extui %19 : vector<2x128xi1> to vector<2x128xi32>
    %21 = arith.sitofp %20 : vector<2x128xi32> to vector<2x128xf32>
    %c0_10 = arith.constant 0 : index
    %c0_11 = arith.constant 0 : index
    %22 = vector.load %arg9[%c0_10, %c0_11] : memref<2x128xf32, #tpu.memory_space<vmem>>, vector<2x128xf32>
    %cst_12 = arith.constant dense<0.000000e+00> : vector<2x128xf32>
    %23 = tpu.matmul %21, %15, %cst_12 {dimension_numbers = #tpu.dot_dimension_numbers<[1], [0], [0], [1], [0, 0, 1, 1], [], []>} : vector<2x128xf32>, vector<128x128xf32>, vector<2x128xf32> -> vector<2x128xf32>
    %24 = arith.addf %22, %23 : vector<2x128xf32>
    %c0_13 = arith.constant 0 : index
    %c0_14 = arith.constant 0 : index
    %25 = vector.load %arg9[%c0_13, %c0_14] : memref<2x128xf32, #tpu.memory_space<vmem>>, vector<2x128xf32>
    tpu.vector_store %arg9[%c0_13, %c0_14], %24 {strides = array<i32>} : memref<2x128xf32, #tpu.memory_space<vmem>>, vector<2x128xf32>,
    %c0_15 = arith.constant 0 : index
    %c0_16 = arith.constant 0 : index
    %26 = vector.load %arg10[%c0_15, %c0_16] : memref<2x1xf32, #tpu.memory_space<vmem>>, vector<2x1xf32>
    %cst_17 = arith.constant dense<0.000000e+00> : vector<2xf32>
    %27 = vector.multi_reduction <add>, %21, %cst_17 [1] : vector<2x128xf32> to vector<2xf32>
    %28 = vector.shape_cast %27 : vector<2xf32> to vector<2x1xf32>
    %29 = arith.addf %26, %28 : vector<2x1xf32>
    %c0_18 = arith.constant 0 : index
    %c0_19 = arith.constant 0 : index
    %30 = vector.load %arg10[%c0_18, %c0_19] : memref<2x1xf32, #tpu.memory_space<vmem>>, vector<2x1xf32>
    tpu.vector_store %arg10[%c0_18, %c0_19], %29 {strides = array<i32>} : memref<2x1xf32, #tpu.memory_space<vmem>>, vector<2x1xf32>,
    %c0_i32_20 = arith.constant 0 : i32
    %31 = arith.cmpi eq, %arg1, %c0_i32_20 : i32
    %32 = arith.extui %31 : i1 to i32
    %c0_i32_21 = arith.constant 0 : i32
    %33 = arith.cmpi ne, %32, %c0_i32_21 : i32
    scf.if %33 {
      %c0_22 = arith.constant 0 : index
      %c0_23 = arith.constant 0 : index
      %34 = vector.load %arg9[%c0_22, %c0_23] : memref<2x128xf32, #tpu.memory_space<vmem>>, vector<2x128xf32>
      %c0_24 = arith.constant 0 : index
      %c0_25 = arith.constant 0 : index
      %35 = vector.load %arg6[%c0_24, %c0_25] : memref<128x128xf32, #tpu.memory_space<vmem>>, vector<128x128xf32>
      %cst_26 = arith.constant dense<0.000000e+00> : vector<2x128xf32>
      %36 = tpu.matmul %34, %35, %cst_26 {dimension_numbers = #tpu.dot_dimension_numbers<[1], [0], [0], [1], [0, 0, 1, 1], [], []>} : vector<2x128xf32>, vector<128x128xf32>, vector<2x128xf32> -> vector<2x128xf32>
      %c0_27 = arith.constant 0 : index
      %c0_28 = arith.constant 0 : index
      %37 = vector.load %arg10[%c0_27, %c0_28] : memref<2x1xf32, #tpu.memory_space<vmem>>, vector<2x1xf32>
      %c0_29 = arith.constant 0 : index
      %c0_30 = arith.constant 0 : index
      %38 = vector.load %arg7[%c0_29, %c0_30] : memref<1x128xf32, #tpu.memory_space<vmem>>, vector<1x128xf32>
      %39 = vector.broadcast %37 : vector<2x1xf32> to vector<2x128xf32>
      %40 = vector.broadcast %38 : vector<1x128xf32> to vector<2x128xf32>
      %41 = arith.mulf %39, %40 : vector<2x128xf32>
      %42 = arith.addf %36, %41 : vector<2x128xf32>
      %c0_31 = arith.constant 0 : index
      %c0_32 = arith.constant 0 : index
      %c0_33 = arith.constant 0 : index
      %43 = vector.load %arg8[%c0_31, %c0_32, %c0_33] : memref<1x2x128xf32, #tpu.memory_space<vmem>>, vector<1x2x128xf32>
      %44 = vector.shape_cast %43 : vector<1x2x128xf32> to vector<2x128xf32>
      %45 = vector.shape_cast %42 : vector<2x128xf32> to vector<1x2x128xf32>
      tpu.vector_store %arg8[%c0_31, %c0_32, %c0_33], %45 {strides = array<i32>} : memref<1x2x128xf32, #tpu.memory_space<vmem>>, vector<1x2x128xf32>,
    } else {
    }
    return
  }
  func.func @transform_0(%arg0: i32, %arg1: i32) -> (i32, i32) {
    %c1_i32 = arith.constant 1 : i32
    %0 = arith.muli %arg0, %c1_i32 : i32
    %1 = arith.addi %0, %arg1 : i32
    %c0_i32 = arith.constant 0 : i32
    %c0_i32_0 = arith.constant 0 : i32
    return %1, %c0_i32 : i32, i32
  }
  func.func @transform_1(%arg0: i32, %arg1: i32) -> (i32, i32) {
    %c1_i32 = arith.constant 1 : i32
    %0 = arith.muli %arg0, %c1_i32 : i32
    %1 = arith.addi %0, %arg1 : i32
    %c0_i32 = arith.constant 0 : i32
    %c0_i32_0 = arith.constant 0 : i32
    return %c0_i32, %1 : i32, i32
  }
  func.func @transform_2(%arg0: i32, %arg1: i32) -> (i32, i32) {
    %c0_i32 = arith.constant 0 : i32
    %c0_i32_0 = arith.constant 0 : i32
    %c0_i32_1 = arith.constant 0 : i32
    return %c0_i32, %c0_i32_0 : i32, i32
  }
  func.func @transform_3(%arg0: i32, %arg1: i32) -> (i32, i32) {
    %c0_i32 = arith.constant 0 : i32
    %c0_i32_0 = arith.constant 0 : i32
    %c0_i32_1 = arith.constant 0 : i32
    return %c0_i32, %c0_i32_0 : i32, i32
  }
  func.func @transform_4(%arg0: i32, %arg1: i32) -> (i32, i32) {
    %c0_i32 = arith.constant 0 : i32
    %c0_i32_0 = arith.constant 0 : i32
    %c0_i32_1 = arith.constant 0 : i32
    return %c0_i32, %c0_i32_0 : i32, i32
  }
  func.func @transform_5(%arg0: i32, %arg1: i32) -> (i32, i32) {
    %c0_i32 = arith.constant 0 : i32
    %c0_i32_0 = arith.constant 0 : i32
    %c0_i32_1 = arith.constant 0 : i32
    return %c0_i32, %c0_i32_0 : i32, i32
  }
  func.func @transform_6(%arg0: i32, %arg1: i32) -> (i32, i32, i32) {
    %c0_i32 = arith.constant 0 : i32
    %c0_i32_0 = arith.constant 0 : i32
    %c0_i32_1 = arith.constant 0 : i32
    return %arg0, %c0_i32, %c0_i32_0 : i32, i32, i32
  }
}

</mosaic_0001>

<llo_original>
// kernel: tpu_custom_call.1
$region0: #{tpu_custom_call.1}
  #allocation0 [shape = 'u32[]', space=smem, size = 0x4, offset = 0x4, fixed_abs, tag = 'smem constant byte address 0x4 - core index']
  #allocation1 [shape = 'u32[144,128]{1,0:T(1,128)}', space=vmem, size = 0x12000, scoped, tag = 'internal scratch']
  #allocation2 [shape = 'f32[2,128]{1,0:T(2,128)}', space=vmem, size = 0x400, scoped, tag = 'scratch operand']
  #allocation3 [shape = 'f32[2,1]{1,0:T(2,128)}', space=vmem, size = 0x400, scoped, tag = 'scratch operand']
  %s0 = inlined_call_operand.vmem [shape: f32[256,32], index: 0, kind: input, shape index: {}]
  %s1 = inlined_call_operand.vmem [shape: s32[1,256], index: 1, kind: input, shape index: {}]
  %s2 = inlined_call_operand.vmem [shape: f32[32,128], index: 2, kind: input, shape index: {}]
  %s3 = inlined_call_operand.vmem [shape: f32[1,128], index: 3, kind: input, shape index: {}]
  %s4 = inlined_call_operand.vmem [shape: f32[128,128], index: 4, kind: input, shape index: {}]
  %s5 = inlined_call_operand.vmem [shape: f32[1,128], index: 5, kind: input, shape index: {}]
  %s6 = inlined_call_operand.hbm [shape: f32[2,2,128], index: 6, kind: output, shape index: {}]
  %s7 = sld [smem:[#allocation0]]
  $region65: #{tpu_custom_call.1} parent=0
    _
  %s9 = ssub.s32 1, %s7
  %s10 = scalar_select 0, %s9, %s7
  $region1: #{tpu_custom_call.1} parent=0
    #allocation4 [shape = 'u8[2048]{0}', space=vmem, size = 0x800, scoped, tag = 'output window, operand 0']
    #allocation5 [shape = 's32[2]{0}', space=sflag, size = 0x8, scoped, tag = 'scoped memory for tpu_custom_call.1']
    %11 = vsyncpa [#allocation5], 0
    %s12 = scalar_lea.sflag [#allocation5], 1
    %13 = vsyncpa %s12, 0
    loop: start=0, step=1, limit=4
    $region2: #{tpu_custom_call.1} parent=1 // loop_pre_header
      _
    $region3: #{tpu_custom_call.1} parent=1 // loop_header
      %s15 = sphi 0, %s19
      %p16 = scmp.ge.s32.totalorder %s15, 4
      %s22 = sphi 0, %s34
      %s23 = sphi 0, %s30
      %s24 = sphi 0, %s22
      %s25 = sphi 0, %s23
      %s26 = sphi 0, %s24
      %s27 = sphi 0, %s25
      %s39 = sphi 0, %s41
      %s42 = sphi 0, %s39
      %s43 = sphi 0, %s42
      %s59 = sphi 0, %s43
      %s67 = sphi 0, %s69
      %s70 = sphi 0, %s67
      %s71 = sphi 0, %s70
      %s87 = sphi 0, %s71
      %s91 = sphi 0, %s91
      %s93 = sphi 0, %s91
      %s94 = sphi 0, %s93
      %s108 = sphi 0, %s94
      %s112 = sphi 0, %s112
      %s114 = sphi 0, %s112
      %s115 = sphi 0, %s114
      %s129 = sphi 0, %s115
      %s133 = sphi 0, %s133
      %s135 = sphi 0, %s133
      %s136 = sphi 0, %s135
      %s150 = sphi 0, %s136
      %s154 = sphi 0, %s154
      %s156 = sphi 0, %s154
      %s157 = sphi 0, %s156
      %s171 = sphi 0, %s157
      %s177 = sphi 0, %s179
      %s180 = sphi 0, %s177
      %s181 = sphi 0, %s180
      %s197 = sphi 0, %s181
    $region4: #{tpu_custom_call.1} parent=1 // loop_header_branch
      %18 = sbr.rel (%p16) target = $region8
    $region5: #{tpu_custom_call.1} parent=1 // loop_body
      %s20 = ssub.s32 %s15, 1
      %s21 = ssub.s32 %s15, 2
      %s28 = sadd.s32 1, %s23
      %p29 = scmp.ge.s32.totalorder %s28, 1
      %s30 = scalar_select %p29, 0, %s28
      %s31 = sadd.s32 1, %s22
      %s32 = scalar_select %p29, %s31, %s22
      %p33 = scmp.ge.s32.totalorder %s32, 2
      %s34 = scalar_select %p33, 0, %s32
      %s35 = sadd.s32 %s22, %s23
      %s36 = sadd.s32 %s34, %s30
      %s37 = ssub.s32 %s35, %s36
      %p38 = scmp.eq.s32.totalorder %s37, 0
      %s40 = sadd.s32 %s39, 1
      %s41 = scalar_select %p38, %s39, %s40
      %p44 = pneg %p38
      %p45 = scmp.eq.s32.totalorder %s15, 1
      %p46 = por %p44, %p45
      %p47 = scmp.ne.s32.totalorder %s39, %s42
      %p48 = scmp.eq.s32.totalorder %s15, 0
      %p49 = por %p47, %p48
      %p50 = scmp.ne.s32.totalorder %s39, %s42
      %p51 = scmp.eq.s32.totalorder %s20, 1
      %p52 = por %p50, %p51
      %p53 = scmp.ne.s32.totalorder %s42, %s43
      %p54 = scmp.eq.s32.totalorder %s20, 0
      %p55 = por %p53, %p54
      %p56 = scmp.ne.s32.totalorder %s42, %s43
      %p57 = scmp.eq.s32.totalorder %s21, 1
      %p58 = por %p56, %p57
      %p60 = scmp.ne.s32.totalorder %s43, %s59
      %p61 = scmp.eq.s32.totalorder %s21, 0
      %p62 = por %p60, %p61
      %s63 = sadd.s32 %s22, %s23
      %s64 = sadd.s32 %s34, %s30
      %s65 = ssub.s32 %s63, %s64
      %p66 = scmp.eq.s32.totalorder %s65, 0
      %s68 = sadd.s32 %s67, 1
      %s69 = scalar_select %p66, %s67, %s68
      %p72 = pneg %p66
      %p73 = scmp.eq.s32.totalorder %s15, 1
      %p74 = por %p72, %p73
      %p75 = scmp.ne.s32.totalorder %s67, %s70
      %p76 = scmp.eq.s32.totalorder %s15, 0
      %p77 = por %p75, %p76
      %p78 = scmp.ne.s32.totalorder %s67, %s70
      %p79 = scmp.eq.s32.totalorder %s20, 1
      %p80 = por %p78, %p79
      %p81 = scmp.ne.s32.totalorder %s70, %s71
      %p82 = scmp.eq.s32.totalorder %s20, 0
      %p83 = por %p81, %p82
      %p84 = scmp.ne.s32.totalorder %s70, %s71
      %p85 = scmp.eq.s32.totalorder %s21, 1
      %p86 = por %p84, %p85
      %p88 = scmp.ne.s32.totalorder %s71, %s87
      %p89 = scmp.eq.s32.totalorder %s21, 0
      %p90 = por %p88, %p89
      %s92 = sadd.s32 %s91, 1
      %p95 = scmp.eq.s32.totalorder %s15, 1
      %p96 = scmp.ne.s32.totalorder %s91, %s93
      %p97 = scmp.eq.s32.totalorder %s15, 0
      %p98 = por %p96, %p97
      %p99 = scmp.ne.s32.totalorder %s91, %s93
      %p100 = scmp.eq.s32.totalorder %s20, 1
      %p101 = por %p99, %p100
      %p102 = scmp.ne.s32.totalorder %s93, %s94
      %p103 = scmp.eq.s32.totalorder %s20, 0
      %p104 = por %p102, %p103
      %p105 = scmp.ne.s32.totalorder %s93, %s94
      %p106 = scmp.eq.s32.totalorder %s21, 1
      %p107 = por %p105, %p106
      %p109 = scmp.ne.s32.totalorder %s94, %s108
      %p110 = scmp.eq.s32.totalorder %s21, 0
      %p111 = por %p109, %p110
      %s113 = sadd.s32 %s112, 1
      %p116 = scmp.eq.s32.totalorder %s15, 1
      %p117 = scmp.ne.s32.totalorder %s112, %s114
      %p118 = scmp.eq.s32.totalorder %s15, 0
      %p119 = por %p117, %p118
      %p120 = scmp.ne.s32.totalorder %s112, %s114
      %p121 = scmp.eq.s32.totalorder %s20, 1
      %p122 = por %p120, %p121
      %p123 = scmp.ne.s32.totalorder %s114, %s115
      %p124 = scmp.eq.s32.totalorder %s20, 0
      %p125 = por %p123, %p124
      %p126 = scmp.ne.s32.totalorder %s114, %s115
      %p127 = scmp.eq.s32.totalorder %s21, 1
      %p128 = por %p126, %p127
      %p130 = scmp.ne.s32.totalorder %s115, %s129
      %p131 = scmp.eq.s32.totalorder %s21, 0
      %p132 = por %p130, %p131
      %s134 = sadd.s32 %s133, 1
      %p137 = scmp.eq.s32.totalorder %s15, 1
      %p138 = scmp.ne.s32.totalorder %s133, %s135
      %p139 = scmp.eq.s32.totalorder %s15, 0
      %p140 = por %p138, %p139
      %p141 = scmp.ne.s32.totalorder %s133, %s135
      %p142 = scmp.eq.s32.totalorder %s20, 1
      %p143 = por %p141, %p142
      %p144 = scmp.ne.s32.totalorder %s135, %s136
      %p145 = scmp.eq.s32.totalorder %s20, 0
      %p146 = por %p144, %p145
      %p147 = scmp.ne.s32.totalorder %s135, %s136
      %p148 = scmp.eq.s32.totalorder %s21, 1
      %p149 = por %p147, %p148
      %p151 = scmp.ne.s32.totalorder %s136, %s150
      %p152 = scmp.eq.s32.totalorder %s21, 0
      %p153 = por %p151, %p152
      %s155 = sadd.s32 %s154, 1
      %p158 = scmp.eq.s32.totalorder %s15, 1
      %p159 = scmp.ne.s32.totalorder %s154, %s156
      %p160 = scmp.eq.s32.totalorder %s15, 0
      %p161 = por %p159, %p160
      %p162 = scmp.ne.s32.totalorder %s154, %s156
      %p163 = scmp.eq.s32.totalorder %s20, 1
      %p164 = por %p162, %p163
      %p165 = scmp.ne.s32.totalorder %s156, %s157
      %p166 = scmp.eq.s32.totalorder %s20, 0
      %p167 = por %p165, %p166
      %p168 = scmp.ne.s32.totalorder %s156, %s157
      %p169 = scmp.eq.s32.totalorder %s21, 1
      %p170 = por %p168, %p169
      %p172 = scmp.ne.s32.totalorder %s157, %s171
      %p173 = scmp.eq.s32.totalorder %s21, 0
      %p174 = por %p172, %p173
      %s175 = ssub.s32 %s22, %s34
      %p176 = scmp.eq.s32.totalorder %s175, 0
      %s178 = sadd.s32 %s177, 1
      %s179 = scalar_select %p176, %s177, %s178
      %p182 = pneg %p176
      %p183 = scmp.eq.s32.totalorder %s15, 1
      %p184 = por %p182, %p183
      %p185 = scmp.ne.s32.totalorder %s177, %s180
      %p186 = scmp.eq.s32.totalorder %s15, 0
      %p187 = por %p185, %p186
      %p188 = scmp.ne.s32.totalorder %s177, %s180
      %p189 = scmp.eq.s32.totalorder %s20, 1
      %p190 = por %p188, %p189
      %p191 = scmp.ne.s32.totalorder %s180, %s181
      %p192 = scmp.eq.s32.totalorder %s20, 0
      %p193 = por %p191, %p192
      %p194 = scmp.ne.s32.totalorder %s180, %s181
      %p195 = scmp.eq.s32.totalorder %s21, 1
      %p196 = por %p194, %p195
      %p198 = scmp.ne.s32.totalorder %s181, %s197
      %p199 = scmp.eq.s32.totalorder %s21, 0
      %p200 = por %p198, %p199
      %p201 = scmp.le.s32.totalorder 1, %s15
      %p202 = scmp.lt.s32.totalorder %s15, 3
      %p203 = pnand %p201, %p202
      %p204 = pneg %p203
      // Predicated region
      $region9: #{tpu_custom_call.1} parent=5 // pred_check
        _
      $region10: #{tpu_custom_call.1} parent=5 // pred_check_branch
        %206 = sbr.rel (%p203) target = $region12
      $region11: #{tpu_custom_call.1} parent=5 // pred_region
        %s207 = ssub.s32 %s15, 1
        // Predicated region
        $region13: #{tpu_custom_call.1} parent=11 // pred_check
          %p208 = pneg %p104
        $region14: #{tpu_custom_call.1} parent=11 // pred_check_branch
          %210 = sbr.rel (%p208) target = $region16
        $region15: #{tpu_custom_call.1} parent=11 // pred_region
          _
        $region16: #{tpu_custom_call.1} parent=11 // pred_fallthru
          _
        // Predicated region
        $region17: #{tpu_custom_call.1} parent=11 // pred_check
          %p211 = pneg %p125
        $region18: #{tpu_custom_call.1} parent=11 // pred_check_branch
          %213 = sbr.rel (%p211) target = $region20
        $region19: #{tpu_custom_call.1} parent=11 // pred_region
          _
        $region20: #{tpu_custom_call.1} parent=11 // pred_fallthru
          _
        // Predicated region
        $region21: #{tpu_custom_call.1} parent=11 // pred_check
          %p214 = pneg %p146
        $region22: #{tpu_custom_call.1} parent=11 // pred_check_branch
          %216 = sbr.rel (%p214) target = $region24
        $region23: #{tpu_custom_call.1} parent=11 // pred_region
          _
        $region24: #{tpu_custom_call.1} parent=11 // pred_fallthru
          _
        // Predicated region
        $region25: #{tpu_custom_call.1} parent=11 // pred_check
          %p217 = pneg %p167
        $region26: #{tpu_custom_call.1} parent=11 // pred_check_branch
          %219 = sbr.rel (%p217) target = $region28
        $region27: #{tpu_custom_call.1} parent=11 // pred_region
          _
        $region28: #{tpu_custom_call.1} parent=11 // pred_fallthru
          _
      $region12: #{tpu_custom_call.1} parent=5 // pred_fallthru
        _
      %p220 = scmp.lt.s32.totalorder %s15, 2
      // Predicated region
      $region29: #{tpu_custom_call.1} parent=5 // pred_check
        %p221 = pneg %p220
      $region30: #{tpu_custom_call.1} parent=5 // pred_check_branch
        %223 = sbr.rel (%p221) target = $region32
      $region31: #{tpu_custom_call.1} parent=5 // pred_region
        // Predicated region
        $region33: #{tpu_custom_call.1} parent=31 // pred_check
          %p224 = pneg %p49
        $region34: #{tpu_custom_call.1} parent=31 // pred_check_branch
          %226 = sbr.rel (%p224) target = $region36
        $region35: #{tpu_custom_call.1} parent=31 // pred_region
          %s227 = sadd.s32 %s22, %s23
          %s228 = smul.u32 16, %s227
          %p229 = scmp.lt.s32.totalorder %s228, 31
          %s230 = scalar_select %p229, %s228, 31
          %s231 = smul.addr %s230, 8
          %s232 = scalar_lea.vmem %s0, %s231
          %s233 = sadd.s32 %s22, %s23
          %s234 = smul.u32 16, %s233
        $region36: #{tpu_custom_call.1} parent=31 // pred_fallthru
          _
        // Predicated region
        $region37: #{tpu_custom_call.1} parent=31 // pred_check
          %p235 = pneg %p77
        $region38: #{tpu_custom_call.1} parent=31 // pred_check_branch
          %237 = sbr.rel (%p235) target = $region40
        $region39: #{tpu_custom_call.1} parent=31 // pred_region
          %s238 = sadd.s32 %s22, %s23
          %p239 = scmp.lt.s32.totalorder %s238, 1
          %s240 = scalar_select %p239, %s238, 1
          %s241 = scalar_lea.vmem %s1, %s240
          %s242 = sadd.s32 %s22, %s23
        $region40: #{tpu_custom_call.1} parent=31 // pred_fallthru
          _
      $region32: #{tpu_custom_call.1} parent=5 // pred_fallthru
        _
      %p243 = scmp.le.s32.totalorder 1, %s15
      %p244 = scmp.lt.s32.totalorder %s15, 3
      %p245 = pnand %p243, %p244
      %p246 = pneg %p245
      // Predicated region
      $region41: #{tpu_custom_call.1} parent=5 // pred_check
        _
      $region42: #{tpu_custom_call.1} parent=5 // pred_check_branch
        %248 = sbr.rel (%p245) target = $region44
      $region43: #{tpu_custom_call.1} parent=5 // pred_region
        %s249 = ssub.s32 %s15, 1
        %s250 = sadd.s32 %s24, %s25
        %s251 = smul.u32 16, %s250
        %p252 = scmp.lt.s32.totalorder %s251, 31
        %s253 = scalar_select %p252, %s251, 31
        %s254 = smul.addr %s253, 8
        %s255 = scalar_lea.vmem %s0, %s254
        %p256 = pneg %p55
        %p257 = pneg %p52
        %s258 = sadd.s32 %s24, %s25
        %p259 = scmp.lt.s32.totalorder %s258, 1
        %s260 = scalar_select %p259, %s258, 1
        %s261 = scalar_lea.vmem %s1, %s260
        %p262 = pneg %p83
        %p263 = pneg %p80
        %p264 = pneg %p104
        %p265 = pneg %p101
        %p266 = pneg %p125
        %p267 = pneg %p122
        %p268 = pneg %p146
        %p269 = pneg %p143
        %p270 = pneg %p167
        %p271 = pneg %p164
        %p272 = pneg %p193
        %p273 = pneg %p190
        %s274 = sand.u32 %s180, 1
        %s275 = scalar_lea.sflag [#allocation5], %s274
        %s276 = sand.u32 %s180, 1
        %s277 = smul.addr %s276, 2
        %s278 = scalar_lea.vmem [#allocation4], %s277
        %s279 = sadd.s32 %s24, %s25
        %s280 = smul.u32 16, %s279
        %p281 = scmp.lt.s32.totalorder %s280, 31
        %s282 = scalar_select %p281, %s280, 31
        %s283 = smul.addr %s282, 8
        %s284 = scalar_lea.vmem %s0, %s283
        %s285 = sadd.s32 %s24, %s25
        %s286 = smul.u32 16, %s285
        %s287 = sadd.s32 %s24, %s25
        %p288 = scmp.lt.s32.totalorder %s287, 1
        %s289 = scalar_select %p288, %s287, 1
        %s290 = scalar_lea.vmem %s1, %s289
        %s291 = sadd.s32 %s24, %s25
        %p292 = scmp.eq.s32.totalorder %s25, 0
        // Predicated region
        $region45: #{tpu_custom_call.1} parent=43 // pred_check
          %p293 = pneg %p292
        $region46: #{tpu_custom_call.1} parent=43 // pred_check_branch
          %295 = sbr.rel (%p293) target = $region48
        $region47: #{tpu_custom_call.1} parent=43 // pred_region
          %296 = vst [vmem:[#allocation2] sm:$0x3] 0.0
          %vm297 = vcmask 1024
          %298 = vst.msk [vmem:[#allocation3] sm:$0x3] %vm297, 0.0
        $region48: #{tpu_custom_call.1} parent=43 // pred_fallthru
          _
        %v299 = vld [vmem:[%s284] sm:$0xff]
        %v300 = vld [vmem:[%s284 + $0x8] sm:$0xff]
        %v301 = vld [vmem:[%s284 + $0x10] sm:$0xff]
        %v302 = vld [vmem:[%s284 + $0x18] sm:$0xff]
        %v303 = vld [vmem:[%s284 + $0x20] sm:$0xff]
        %v304 = vld [vmem:[%s284 + $0x28] sm:$0xff]
        %v305 = vld [vmem:[%s284 + $0x30] sm:$0xff]
        %v306 = vld [vmem:[%s284 + $0x38] sm:$0xff]
        %v307 = vld [vmem:[%s284 + $0x40] sm:$0xff]
        %v308 = vld [vmem:[%s284 + $0x48] sm:$0xff]
        %v309 = vld [vmem:[%s284 + $0x50] sm:$0xff]
        %v310 = vld [vmem:[%s284 + $0x58] sm:$0xff]
        %v311 = vld [vmem:[%s284 + $0x60] sm:$0xff]
        %v312 = vld [vmem:[%s284 + $0x68] sm:$0xff]
        %v313 = vld [vmem:[%s284 + $0x70] sm:$0xff]
        %v314 = vld [vmem:[%s284 + $0x78] sm:$0xff]
        %v315 = vld [vmem:[%s2] sm:$0xff]
        %v316 = vld [vmem:[%s2 + $0x8] sm:$0xff]
        %v317 = vld [vmem:[%s2 + $0x10] sm:$0xff]
        %v318 = vld [vmem:[%s2 + $0x18] sm:$0xff]
        %v319 = vld [vmem:[%s3] sm:$0x1]
        %v321 = vlaneseq
        %v322 = vshrl.u32 %v321, 7
        %v323 = vsub.s32 0, %v322
        %v324 = vrot.slane %v319, %v323
        %vm326 = vcmask 261120
        %v328 = vsel %vm326, %v299, 0
        %v331 = vsel %vm326, %v300, 0
        %v334 = vsel %vm326, %v301, 0
        %v337 = vsel %vm326, %v302, 0
        %v340 = vsel %vm326, %v303, 0
        %v343 = vsel %vm326, %v304, 0
        %v346 = vsel %vm326, %v305, 0
        %v349 = vsel %vm326, %v306, 0
        %v352 = vsel %vm326, %v307, 0
        %v355 = vsel %vm326, %v308, 0
        %v358 = vsel %vm326, %v309, 0
        %v361 = vsel %vm326, %v310, 0
        %v364 = vsel %vm326, %v311, 0
        %v367 = vsel %vm326, %v312, 0
        %v370 = vsel %vm326, %v313, 0
        %v373 = vsel %vm326, %v314, 0
        %375 = vmatprep.subr.mxu0 0.0
        %376 = vmatpush1.msra.mxu0 %v315
        %377 = vmatprep.subr.mxu0 0.0
        %378 = vmatpush1.msra.mxu0 %v316
        %379 = vmatprep.subr.mxu0 0.0
        %380 = vmatpush1.msra.mxu0 %v317
        %381 = vmatprep.subr.mxu0 0.0
        %382 = vmatpush1.msra.mxu0 %v318
        %383 = vmatprep.subr.mxu0 0.0
        %384 = vmatpush1.msra.mxu0 0.0
        %385 = vmatprep.subr.mxu0 0.0
        %386 = vmatpush1.msra.mxu0 0.0
        %387 = vmatprep.subr.mxu0 0.0
        %388 = vmatpush1.msra.mxu0 0.0
        %389 = vmatprep.subr.mxu0 0.0
        %390 = vmatpush1.msra.mxu0 0.0
        %391 = vmatprep.subr.mxu0 0.0
        %392 = vmatpush1.msra.mxu0 0.0
        %393 = vmatprep.subr.mxu0 0.0
        %394 = vmatpush1.msra.mxu0 0.0
        %395 = vmatprep.subr.mxu0 0.0
        %396 = vmatpush1.msra.mxu0 0.0
        %397 = vmatprep.subr.mxu0 0.0
        %398 = vmatpush1.msra.mxu0 0.0
        %399 = vmatprep.subr.mxu0 0.0
        %400 = vmatpush1.msra.mxu0 0.0
        %401 = vmatprep.subr.mxu0 0.0
        %402 = vmatpush1.msra.mxu0 0.0
        %403 = vmatprep.subr.mxu0 0.0
        %404 = vmatpush1.msra.mxu0 0.0
        %405 = vmatprep.subr.mxu0 0.0
        %406 = vmatpush1.msra.mxu0 0.0
        %407 = vmatprep.subr.mxu0 0.0
        %408 = vmatpush1.msra.mxu0 0.0
        %409 = vmatprep.subr.mxu0 0.0
        %410 = vmatpush1.msra.mxu0 0.0
        %411 = vmatprep.subr.mxu0 0.0
        %412 = vmatpush1.msra.mxu0 0.0
        %413 = vmatprep.subr.mxu0 0.0
        %414 = vmatpush1.msra.mxu0 0.0
        %415 = vmatprep.subr.mxu0 0.0
        %416 = vmatpush1.msra.mxu0 0.0
        %417 = vmatprep.subr.mxu0 0.0
        %418 = vmatpush1.msra.mxu0 0.0
        %419 = vmatprep.subr.mxu0 0.0
        %420 = vmatpush1.msra.mxu0 0.0
        %421 = vmatprep.subr.mxu0 0.0
        %422 = vmatpush1.msra.mxu0 0.0
        %423 = vmatprep.subr.mxu0 0.0
        %424 = vmatpush1.msra.mxu0 0.0
        %425 = vmatprep.subr.mxu0 0.0
        %426 = vmatpush1.msra.mxu0 0.0
        %427 = vmatprep.subr.mxu0 0.0
        %428 = vmatpush1.msra.mxu0 0.0
        %429 = vmatprep.subr.mxu0 0.0
        %430 = vmatpush1.msra.mxu0 0.0
        %431 = vmatprep.subr.mxu0 0.0
        %432 = vmatpush1.msra.mxu0 0.0
        %433 = vmatprep.subr.mxu0 0.0
        %434 = vmatpush1.msra.mxu0 0.0
        %435 = vmatprep.subr.mxu0 0.0
        %436 = vmatpush1.msra.mxu0 0.0
        %437 = vmatprep.subr.mxu0 0.0
        %438 = vmatpush1.msra.mxu0 0.0
        %439 = vmatprep.mubr.f32.mxu0 0.0
        %440 = vmatmul.mubr.f32.gmra.mrb[0].mxu0 %v328
        %v441 = vpop.f32.mrb[0].mxu0
        %v442 = vadd.f32 %v324, %v441
        %v443 = vpop.f32.mrb[0].mxu0
        %444 = vmatprep.mubr.f32.mxu0 0.0
        %445 = vmatmul.mubr.f32.gmra.mrb[0].mxu0 %v331
        %v446 = vpop.f32.mrb[0].mxu0
        %v447 = vadd.f32 %v324, %v446
        %v448 = vpop.f32.mrb[0].mxu0
        %449 = vmatprep.mubr.f32.mxu0 0.0
        %450 = vmatmul.mubr.f32.gmra.mrb[0].mxu0 %v334
        %v451 = vpop.f32.mrb[0].mxu0
        %v452 = vadd.f32 %v324, %v451
        %v453 = vpop.f32.mrb[0].mxu0
        %454 = vmatprep.mubr.f32.mxu0 0.0
        %455 = vmatmul.mubr.f32.gmra.mrb[0].mxu0 %v337
        %v456 = vpop.f32.mrb[0].mxu0
        %v457 = vadd.f32 %v324, %v456
        %v458 = vpop.f32.mrb[0].mxu0
        %459 = vmatprep.mubr.f32.mxu0 0.0
        %460 = vmatmul.mubr.f32.gmra.mrb[0].mxu0 %v340
        %v461 = vpop.f32.mrb[0].mxu0
        %v462 = vadd.f32 %v324, %v461
        %v463 = vpop.f32.mrb[0].mxu0
        %464 = vmatprep.mubr.f32.mxu0 0.0
        %465 = vmatmul.mubr.f32.gmra.mrb[0].mxu0 %v343
        %v466 = vpop.f32.mrb[0].mxu0
        %v467 = vadd.f32 %v324, %v466
        %v468 = vpop.f32.mrb[0].mxu0
        %469 = vmatprep.mubr.f32.mxu0 0.0
        %470 = vmatmul.mubr.f32.gmra.mrb[0].mxu0 %v346
        %v471 = vpop.f32.mrb[0].mxu0
        %v472 = vadd.f32 %v324, %v471
        %v473 = vpop.f32.mrb[0].mxu0
        %474 = vmatprep.mubr.f32.mxu0 0.0
        %475 = vmatmul.mubr.f32.gmra.mrb[0].mxu0 %v349
        %v476 = vpop.f32.mrb[0].mxu0
        %v477 = vadd.f32 %v324, %v476
        %v478 = vpop.f32.mrb[0].mxu0
        %479 = vmatprep.mubr.f32.mxu0 0.0
        %480 = vmatmul.mubr.f32.gmra.mrb[0].mxu0 %v352
        %v481 = vpop.f32.mrb[0].mxu0
        %v482 = vadd.f32 %v324, %v481
        %v483 = vpop.f32.mrb[0].mxu0
        %484 = vmatprep.mubr.f32.mxu0 0.0
        %485 = vmatmul.mubr.f32.gmra.mrb[0].mxu0 %v355
        %v486 = vpop.f32.mrb[0].mxu0
        %v487 = vadd.f32 %v324, %v486
        %v488 = vpop.f32.mrb[0].mxu0
        %489 = vmatprep.mubr.f32.mxu0 0.0
        %490 = vmatmul.mubr.f32.gmra.mrb[0].mxu0 %v358
        %v491 = vpop.f32.mrb[0].mxu0
        %v492 = vadd.f32 %v324, %v491
        %v493 = vpop.f32.mrb[0].mxu0
        %494 = vmatprep.mubr.f32.mxu0 0.0
        %495 = vmatmul.mubr.f32.gmra.mrb[0].mxu0 %v361
        %v496 = vpop.f32.mrb[0].mxu0
        %v497 = vadd.f32 %v324, %v496
        %v498 = vpop.f32.mrb[0].mxu0
        %499 = vmatprep.mubr.f32.mxu0 0.0
        %500 = vmatmul.mubr.f32.gmra.mrb[0].mxu0 %v364
        %v501 = vpop.f32.mrb[0].mxu0
        %v502 = vadd.f32 %v324, %v501
        %v503 = vpop.f32.mrb[0].mxu0
        %504 = vmatprep.mubr.f32.mxu0 0.0
        %505 = vmatmul.mubr.f32.gmra.mrb[0].mxu0 %v367
        %v506 = vpop.f32.mrb[0].mxu0
        %v507 = vadd.f32 %v324, %v506
        %v508 = vpop.f32.mrb[0].mxu0
        %509 = vmatprep.mubr.f32.mxu0 0.0
        %510 = vmatmul.mubr.f32.gmra.mrb[0].mxu0 %v370
        %v511 = vpop.f32.mrb[0].mxu0
        %v512 = vadd.f32 %v324, %v511
        %v513 = vpop.f32.mrb[0].mxu0
        %514 = vmatprep.mubr.f32.mxu0 0.0
        %515 = vmatmul.mubr.f32.gmra.mrb[0].mxu0 %v373
        %v516 = vpop.f32.mrb[0].mxu0
        %v517 = vadd.f32 %v324, %v516
        %v518 = vpop.f32.mrb[0].mxu0
        %519 = vdwg.mxu0
        %v520 = vsub.f32 0.0, %v442
        %v521 = vsub.f32 0.0, %v447
        %v522 = vsub.f32 0.0, %v452
        %v523 = vsub.f32 0.0, %v457
        %v524 = vsub.f32 0.0, %v462
        %v525 = vsub.f32 0.0, %v467
        %v526 = vsub.f32 0.0, %v472
        %v527 = vsub.f32 0.0, %v477
        %v528 = vsub.f32 0.0, %v482
        %v529 = vsub.f32 0.0, %v487
        %v530 = vsub.f32 0.0, %v492
        %v531 = vsub.f32 0.0, %v497
        %v532 = vsub.f32 0.0, %v502
        %v533 = vsub.f32 0.0, %v507
        %v534 = vsub.f32 0.0, %v512
        %v535 = vsub.f32 0.0, %v517
        %v536 = vmul.f32 %v520, 1.442695
        %v537 = vpow.pop %v536
        %v538 = vmul.f32 %v521, 1.442695
        %v539 = vpow.pop %v538
        %v540 = vmul.f32 %v522, 1.442695
        %v541 = vpow.pop %v540
        %v542 = vmul.f32 %v523, 1.442695
        %v543 = vpow.pop %v542
        %v544 = vmul.f32 %v524, 1.442695
        %v545 = vpow.pop %v544
        %v546 = vmul.f32 %v525, 1.442695
        %v547 = vpow.pop %v546
        %v548 = vmul.f32 %v526, 1.442695
        %v549 = vpow.pop %v548
        %v550 = vmul.f32 %v527, 1.442695
        %v551 = vpow.pop %v550
        %v552 = vmul.f32 %v528, 1.442695
        %v553 = vpow.pop %v552
        %v554 = vmul.f32 %v529, 1.442695
        %v555 = vpow.pop %v554
        %v556 = vmul.f32 %v530, 1.442695
        %v557 = vpow.pop %v556
        %v558 = vmul.f32 %v531, 1.442695
        %v559 = vpow.pop %v558
        %v560 = vmul.f32 %v532, 1.442695
        %v561 = vpow.pop %v560
        %v562 = vmul.f32 %v533, 1.442695
        %v563 = vpow.pop %v562
        %v564 = vmul.f32 %v534, 1.442695
        %v565 = vpow.pop %v564
        %v566 = vmul.f32 %v535, 1.442695
        %v567 = vpow.pop %v566
        %v568 = vadd.f32 %v537, 1.0
        %v569 = vadd.f32 %v539, 1.0
        %v570 = vadd.f32 %v541, 1.0
        %v571 = vadd.f32 %v543, 1.0
        %v572 = vadd.f32 %v545, 1.0
        %v573 = vadd.f32 %v547, 1.0
        %v574 = vadd.f32 %v549, 1.0
        %v575 = vadd.f32 %v551, 1.0
        %v576 = vadd.f32 %v553, 1.0
        %v577 = vadd.f32 %v555, 1.0
        %v578 = vadd.f32 %v557, 1.0
        %v579 = vadd.f32 %v559, 1.0
        %v580 = vadd.f32 %v561, 1.0
        %v581 = vadd.f32 %v563, 1.0
        %v582 = vadd.f32 %v565, 1.0
        %v583 = vadd.f32 %v567, 1.0
        %v584 = vrcp.pop %v568
        %v585 = vrcp.pop %v569
        %v586 = vrcp.pop %v570
        %v587 = vrcp.pop %v571
        %v588 = vrcp.pop %v572
        %v589 = vrcp.pop %v573
        %v590 = vrcp.pop %v574
        %v591 = vrcp.pop %v575
        %v592 = vrcp.pop %v576
        %v593 = vrcp.pop %v577
        %v594 = vrcp.pop %v578
        %v595 = vrcp.pop %v579
        %v596 = vrcp.pop %v580
        %v597 = vrcp.pop %v581
        %v598 = vrcp.pop %v582
        %v599 = vrcp.pop %v583
        %v600 = vmul.f32 %v442, %v584
        %v601 = vmul.f32 %v447, %v585
        %v602 = vmul.f32 %v452, %v586
        %v603 = vmul.f32 %v457, %v587
        %v604 = vmul.f32 %v462, %v588
        %v605 = vmul.f32 %v467, %v589
        %v606 = vmul.f32 %v472, %v590
        %v607 = vmul.f32 %v477, %v591
        %v608 = vmul.f32 %v482, %v592
        %v609 = vmul.f32 %v487, %v593
        %v610 = vmul.f32 %v492, %v594
        %v611 = vmul.f32 %v497, %v595
        %v612 = vmul.f32 %v502, %v596
        %v613 = vmul.f32 %v507, %v597
        %v614 = vmul.f32 %v512, %v598
        %v615 = vmul.f32 %v517, %v599
        %v616 = vlaneseq
        %v617 = vshrl.u32 %v616, 7
        %v618 = vld [vmem:[%s290] sm:$0x1]
        %v619 = vlaneseq
        %v620 = vshrl.u32 %v619, 7
        %v621 = vsub.s32 0, %v620
        %v622 = vrot.slane %v618, %v621
        %vm623 = vcmp.eq.s32.totalorder %v617, %v622
        %v624 = vsel %vm623, 1, 0
        %v625 = vcvt.s32.f32 %v624
        %v626 = vld [vmem:[#allocation2] sm:$0x3]
        %627 = vmatprep.subr.mxu0 0.0
        %628 = vmatpush1.msra.mxu0 %v600
        %629 = vmatprep.subr.mxu0 0.0
        %630 = vmatpush1.msra.mxu0 %v601
        %631 = vmatprep.subr.mxu0 0.0
        %632 = vmatpush1.msra.mxu0 %v602
        %633 = vmatprep.subr.mxu0 0.0
        %634 = vmatpush1.msra.mxu0 %v603
        %635 = vmatprep.subr.mxu0 0.0
        %636 = vmatpush1.msra.mxu0 %v604
        %637 = vmatprep.subr.mxu0 0.0
        %638 = vmatpush1.msra.mxu0 %v605
        %639 = vmatprep.subr.mxu0 0.0
        %640 = vmatpush1.msra.mxu0 %v606
        %641 = vmatprep.subr.mxu0 0.0
        %642 = vmatpush1.msra.mxu0 %v607
        %643 = vmatprep.subr.mxu0 0.0
        %644 = vmatpush1.msra.mxu0 %v608
        %645 = vmatprep.subr.mxu0 0.0
        %646 = vmatpush1.msra.mxu0 %v609
        %647 = vmatprep.subr.mxu0 0.0
        %648 = vmatpush1.msra.mxu0 %v610
        %649 = vmatprep.subr.mxu0 0.0
        %650 = vmatpush1.msra.mxu0 %v611
        %651 = vmatprep.subr.mxu0 0.0
        %652 = vmatpush1.msra.mxu0 %v612
        %653 = vmatprep.subr.mxu0 0.0
        %654 = vmatpush1.msra.mxu0 %v613
        %655 = vmatprep.subr.mxu0 0.0
        %656 = vmatpush1.msra.mxu0 %v614
        %657 = vmatprep.subr.mxu0 0.0
        %658 = vmatpush1.msra.mxu0 %v615
        %659 = vmatprep.subr.mxu0 0.0
        %660 = vmatpush1.msra.mxu0 0.0
        %661 = vmatprep.subr.mxu0 0.0
        %662 = vmatpush1.msra.mxu0 0.0
        %663 = vmatprep.subr.mxu0 0.0
        %664 = vmatpush1.msra.mxu0 0.0
        %665 = vmatprep.subr.mxu0 0.0
        %666 = vmatpush1.msra.mxu0 0.0
        %667 = vmatprep.subr.mxu0 0.0
        %668 = vmatpush1.msra.mxu0 0.0
        %669 = vmatprep.subr.mxu0 0.0
        %670 = vmatpush1.msra.mxu0 0.0
        %671 = vmatprep.subr.mxu0 0.0
        %672 = vmatpush1.msra.mxu0 0.0
        %673 = vmatprep.subr.mxu0 0.0
        %674 = vmatpush1.msra.mxu0 0.0
        %675 = vmatprep.subr.mxu0 0.0
        %676 = vmatpush1.msra.mxu0 0.0
        %677 = vmatprep.subr.mxu0 0.0
        %678 = vmatpush1.msra.mxu0 0.0
        %679 = vmatprep.subr.mxu0 0.0
        %680 = vmatpush1.msra.mxu0 0.0
        %681 = vmatprep.subr.mxu0 0.0
        %682 = vmatpush1.msra.mxu0 0.0
        %683 = vmatprep.subr.mxu0 0.0
        %684 = vmatpush1.msra.mxu0 0.0
        %685 = vmatprep.subr.mxu0 0.0
        %686 = vmatpush1.msra.mxu0 0.0
        %687 = vmatprep.subr.mxu0 0.0
        %688 = vmatpush1.msra.mxu0 0.0
        %689 = vmatprep.subr.mxu0 0.0
        %690 = vmatpush1.msra.mxu0 0.0
        %691 = vmatprep.mubr.f32.mxu0 0.0
        %692 = vmatmul.mubr.f32.gmra.mrb[0].mxu0 %v625
        %v693 = vpop.f32.mrb[0].mxu0
        %v694 = vadd.f32 0.0, %v693
        %v695 = vpop.f32.mrb[0].mxu0
        %696 = vdwg.mxu0
        %v697 = vadd.f32 %v626, %v694
        %698 = vst [vmem:[#allocation2] sm:$0x3] %v697
        %v699 = vld [vmem:[#allocation3] sm:$0x3]
        %vm700 = vcmask 1041408
        %v701 = vsel %vm700, %v625, 0.0
        %702 = vadd.xlane.f32.xlu0 %v701
        %v703 = vpop.xlane.xlu0 %702
        %v704 = vadd.f32 %v699, %v703
        %vm705 = vcmask 1024
        %706 = vst.msk [vmem:[#allocation3] sm:$0x3] %vm705, %v704
        // Predicated region
        $region49: #{tpu_custom_call.1} parent=43 // pred_check
          %p707 = pneg %p292
        $region50: #{tpu_custom_call.1} parent=43 // pred_check_branch
          %709 = sbr.rel (%p707) target = $region52
        $region51: #{tpu_custom_call.1} parent=43 // pred_region
          %v710 = vld [vmem:[#allocation2] sm:$0x3]
          %v711 = vld [vmem:[%s4] sm:$0xff]
          %v712 = vld [vmem:[%s4 + $0x8] sm:$0xff]
          %v713 = vld [vmem:[%s4 + $0x10] sm:$0xff]
          %v714 = vld [vmem:[%s4 + $0x18] sm:$0xff]
          %v715 = vld [vmem:[%s4 + $0x20] sm:$0xff]
          %v716 = vld [vmem:[%s4 + $0x28] sm:$0xff]
          %v717 = vld [vmem:[%s4 + $0x30] sm:$0xff]
          %v718 = vld [vmem:[%s4 + $0x38] sm:$0xff]
          %v719 = vld [vmem:[%s4 + $0x40] sm:$0xff]
          %v720 = vld [vmem:[%s4 + $0x48] sm:$0xff]
          %v721 = vld [vmem:[%s4 + $0x50] sm:$0xff]
          %v722 = vld [vmem:[%s4 + $0x58] sm:$0xff]
          %v723 = vld [vmem:[%s4 + $0x60] sm:$0xff]
          %v724 = vld [vmem:[%s4 + $0x68] sm:$0xff]
          %v725 = vld [vmem:[%s4 + $0x70] sm:$0xff]
          %v726 = vld [vmem:[%s4 + $0x78] sm:$0xff]
          %v727 = vld [vmem:[#allocation3] sm:$0x3]
          %v728 = vld [vmem:[%s5] sm:$0x1]
          %730 = vset.pattern.permute.xlu0 0
          %731 = vperm.xlu0 %730, %v727
          %v732 = vpop.permute.xlu0 %731
          %v735 = vlaneseq
          %v736 = vshrl.u32 %v735, 7
          %v737 = vsub.s32 0, %v736
          %v738 = vrot.slane %v728, %v737
          %v740 = vmul.f32 %v732, %v738
          %741 = vmatprep.subr.mxu0 0.0
          %742 = vmatpush1.msra.mxu0 %v711
          %743 = vmatprep.subr.mxu0 0.0
          %744 = vmatpush1.msra.mxu0 %v712
          %745 = vmatprep.subr.mxu0 0.0
          %746 = vmatpush1.msra.mxu0 %v713
          %747 = vmatprep.subr.mxu0 0.0
          %748 = vmatpush1.msra.mxu0 %v714
          %749 = vmatprep.subr.mxu0 0.0
          %750 = vmatpush1.msra.mxu0 %v715
          %751 = vmatprep.subr.mxu0 0.0
          %752 = vmatpush1.msra.mxu0 %v716
          %753 = vmatprep.subr.mxu0 0.0
          %754 = vmatpush1.msra.mxu0 %v717
          %755 = vmatprep.subr.mxu0 0.0
          %756 = vmatpush1.msra.mxu0 %v718
          %757 = vmatprep.subr.mxu0 0.0
          %758 = vmatpush1.msra.mxu0 %v719
          %759 = vmatprep.subr.mxu0 0.0
          %760 = vmatpush1.msra.mxu0 %v720
          %761 = vmatprep.subr.mxu0 0.0
          %762 = vmatpush1.msra.mxu0 %v721
          %763 = vmatprep.subr.mxu0 0.0
          %764 = vmatpush1.msra.mxu0 %v722
          %765 = vmatprep.subr.mxu0 0.0
          %766 = vmatpush1.msra.mxu0 %v723
          %767 = vmatprep.subr.mxu0 0.0
          %768 = vmatpush1.msra.mxu0 %v724
          %769 = vmatprep.subr.mxu0 0.0
          %770 = vmatpush1.msra.mxu0 %v725
          %771 = vmatprep.subr.mxu0 0.0
          %772 = vmatpush1.msra.mxu0 %v726
          %773 = vmatprep.subr.mxu0 0.0
          %774 = vmatpush1.msra.mxu0 0.0
          %775 = vmatprep.subr.mxu0 0.0
          %776 = vmatpush1.msra.mxu0 0.0
          %777 = vmatprep.subr.mxu0 0.0
          %778 = vmatpush1.msra.mxu0 0.0
          %779 = vmatprep.subr.mxu0 0.0
          %780 = vmatpush1.msra.mxu0 0.0
          %781 = vmatprep.subr.mxu0 0.0
          %782 = vmatpush1.msra.mxu0 0.0
          %783 = vmatprep.subr.mxu0 0.0
          %784 = vmatpush1.msra.mxu0 0.0
          %785 = vmatprep.subr.mxu0 0.0
          %786 = vmatpush1.msra.mxu0 0.0
          %787 = vmatprep.subr.mxu0 0.0
          %788 = vmatpush1.msra.mxu0 0.0
          %789 = vmatprep.subr.mxu0 0.0
          %790 = vmatpush1.msra.mxu0 0.0
          %791 = vmatprep.subr.mxu0 0.0
          %792 = vmatpush1.msra.mxu0 0.0
          %793 = vmatprep.subr.mxu0 0.0
          %794 = vmatpush1.msra.mxu0 0.0
          %795 = vmatprep.subr.mxu0 0.0
          %796 = vmatpush1.msra.mxu0 0.0
          %797 = vmatprep.subr.mxu0 0.0
          %798 = vmatpush1.msra.mxu0 0.0
          %799 = vmatprep.subr.mxu0 0.0
          %800 = vmatpush1.msra.mxu0 0.0
          %801 = vmatprep.subr.mxu0 0.0
          %802 = vmatpush1.msra.mxu0 0.0
          %803 = vmatprep.subr.mxu0 0.0
          %804 = vmatpush1.msra.mxu0 0.0
          %805 = vmatprep.mubr.f32.mxu0 0.0
          %806 = vmatmul.mubr.f32.gmra.mrb[0].mxu0 %v710
          %v807 = vpop.f32.mrb[0].mxu0
          %v808 = vadd.f32 %v740, %v807
          %v809 = vpop.f32.mrb[0].mxu0
          %810 = vdwg.mxu0
          %811 = vst [vmem:[%s278] sm:$0x3] %v808
        $region52: #{tpu_custom_call.1} parent=43 // pred_fallthru
          _
        %s812 = sand.u32 %s180, 1
        %s813 = scalar_lea.sflag [#allocation5], %s812
        %s814 = sand.u32 %s180, 1
        %s815 = smul.addr %s814, 2
        %s816 = scalar_lea.vmem [#allocation4], %s815
        // Predicated region
        $region53: #{tpu_custom_call.1} parent=43 // pred_check
          %p817 = pneg %p190
        $region54: #{tpu_custom_call.1} parent=43 // pred_check_branch
          %819 = sbr.rel (%p817) target = $region56
        $region55: #{tpu_custom_call.1} parent=43 // pred_region
          %s821 = ssub.s32 32, 32
          %822 = vsyncadd %s813, %s821
          %s823 = smul.addr %s24, 32
          %s824 = scalar_lea.hbm %s6, %s823
          %s826 = sshll.u32 %s816, 4
          %s827 = int_to_ptr.vmem [resolvable:$true] %s826
          %829 = dma.vmem_to_hbm [thread:$0]  %s827, 32, %s824, %s813
        $region56: #{tpu_custom_call.1} parent=43 // pred_fallthru
          _
      $region44: #{tpu_custom_call.1} parent=5 // pred_fallthru
        _
      %p830 = scmp.le.s32.totalorder 2, %s15
      // Predicated region
      $region57: #{tpu_custom_call.1} parent=5 // pred_check
        %p831 = pneg %p830
      $region58: #{tpu_custom_call.1} parent=5 // pred_check_branch
        %833 = sbr.rel (%p831) target = $region60
      $region59: #{tpu_custom_call.1} parent=5 // pred_region
        %s834 = ssub.s32 %s15, 2
        // Predicated region
        $region61: #{tpu_custom_call.1} parent=59 // pred_check
          %p835 = pneg %p196
        $region62: #{tpu_custom_call.1} parent=59 // pred_check_branch
          %837 = sbr.rel (%p835) target = $region64
        $region63: #{tpu_custom_call.1} parent=59 // pred_region
          %s838 = sand.u32 %s181, 1
          %s839 = scalar_lea.sflag [#allocation5], %s838
          %s840 = sand.u32 %s181, 1
          %s841 = smul.addr %s840, 2
          %s842 = scalar_lea.vmem [#allocation4], %s841
          %843 = dma.done %s839, 32
        $region64: #{tpu_custom_call.1} parent=59 // pred_fallthru
          _
      $region60: #{tpu_custom_call.1} parent=5 // pred_fallthru
        _
    $region6: #{tpu_custom_call.1} parent=1 // loop_footer
      %s19 = sadd.s32 1, %s15
    $region7: #{tpu_custom_call.1} parent=1 // loop_footer_branch
      %14 = sbr.rel target = $region3
    $region8: #{tpu_custom_call.1} parent=1 // loop_exit
      _
    %844 = vsyncpa [#allocation5], 1
    %s845 = scalar_lea.sflag [#allocation5], 1
    %846 = vsyncpa %s845, 1

</llo_original>
